<compile_context>
chip_gen: v7x
topology: tpu7x:2x2x1
jax: 0.10.0
libtpu: 0.0.40
codegen_flags: <defaults>
</compile_context>

<pallas_src>
import functools

import jax
import jax.numpy as jnp
from jax.experimental import pallas as pl
from jax.experimental.pallas import tpu as pltpu


def _ffn_kernel_fused(x_ref, w1_ref, b1_ref, w2_ref, b2_ref, o_ref):
    """Single-shot FFN tile: whole F dimension resident in VMEM.

    x_ref  : (tm, Hp)  bf16
    w1_ref : (Hp, Fp)  bf16
    b1_ref : (1,  Fp)  f32
    w2_ref : (Fp, Op)  bf16
    b2_ref : (1,  Op)  f32
    o_ref  : (tm, Op)
    """
    h = jnp.dot(x_ref[...], w1_ref[...], preferred_element_type=jnp.float32)
    h = jnp.maximum(h + b1_ref[...], 0.0)
    # TODO(synk): training-mode dropout (pltpu.prng_seed + pltpu.prng_random_bits mask/scale)
    # omitted; eval-mode nn.Dropout is the identity, which is what is computed here.
    y = jnp.dot(h.astype(w2_ref.dtype), w2_ref[...],
                preferred_element_type=jnp.float32)
    o_ref[...] = (y + b2_ref[...]).astype(o_ref.dtype)


def _ffn_kernel_tiled(x_ref, w1_ref, b1_ref, w2_ref, b2_ref, o_ref, acc_ref):
    """One (tm, Op) output tile, accumulated over the F (ffn) dimension.

    x_ref  : (tm, Hp)   bf16 activation tile
    w1_ref : (Hp, tf)   bf16 layer-1 weight F-slice
    b1_ref : (1,  tf)   f32  layer-1 bias F-slice
    w2_ref : (tf, Op)   bf16 layer-2 weight F-slice
    b2_ref : (1,  Op)   f32  layer-2 bias
    o_ref  : (tm, Op)   output tile (written at the last reduction step)
    acc_ref: (tm, Op)   f32 VMEM accumulator scratch
    """
    k = pl.program_id(1)

    @pl.when(k == 0)
    def _():
        acc_ref[...] = jnp.zeros_like(acc_ref)

    # layer1 F-slice: bf16 x bf16 -> f32, bias add + ReLU in f32.
    h = jnp.dot(x_ref[...], w1_ref[...], preferred_element_type=jnp.float32)
    h = jnp.maximum(h + b1_ref[...], 0.0)
    # TODO(synk): training-mode dropout omitted (eval-mode identity).

    # layer2 partial product, accumulated in f32.
    acc_ref[...] += jnp.dot(h.astype(w2_ref.dtype), w2_ref[...],
                            preferred_element_type=jnp.float32)

    @pl.when(k == pl.num_programs(1) - 1)
    def _():
        o_ref[...] = (acc_ref[...] + b2_ref[...]).astype(o_ref.dtype)


def _round_up(n, m):
    return ((n + m - 1) // m) * m


@functools.partial(jax.jit, static_argnames=("tm", "tf"))
def ffn_forward(x, w1, b1, w2, b2, *, tm=128, tf=512):
    """x: (B, S, H) f32.  w1: (H, F), b1: (1, F), w2: (F, O), b2: (1, O).  Returns (B, S, O)."""
    B, S, H = x.shape
    F = w1.shape[1]
    O = w2.shape[1]
    M = B * S

    # Lane-dense padding: feature dims -> multiples of 128, rows -> multiple of tm.
    Hp = _round_up(H, 128)
    Op = _round_up(O, 128)
    tf = min(tf, _round_up(F, 128))
    Fp = _round_up(F, tf)
    tm = min(tm, _round_up(M, 8))       # don't burn MXU rows on padding at tiny M
    Mp = _round_up(M, tm)

    compute_dtype = jnp.bfloat16
    x2d = jnp.pad(x.reshape(M, H), ((0, Mp - M), (0, Hp - H))).astype(compute_dtype)
    w1p = jnp.pad(w1, ((0, Hp - H), (0, Fp - F))).astype(compute_dtype)
    b1p = jnp.pad(b1, ((0, 0), (0, Fp - F))).astype(jnp.float32)
    w2p = jnp.pad(w2, ((0, Fp - F), (0, Op - O))).astype(compute_dtype)
    b2p = jnp.pad(b2, ((0, 0), (0, Op - O))).astype(jnp.float32)

    out_itemsize = jnp.dtype(x.dtype).itemsize
    # VMEM budget: 2x pipeline buffering on every input/output block + accumulator scratch.
    vmem_need = (
        2 * (tm * Hp * 2          # x tile (bf16)
             + Hp * tf * 2        # w1 tile (bf16)
             + tf * 4             # b1 tile (f32)
             + tf * Op * 2        # w2 tile (bf16)
             + Op * 4             # b2 (f32)
             + tm * Op * out_itemsize)  # output tile
        + tm * Op * 4)            # f32 accumulator scratch
    vmem_limit = int(min(max(4 * vmem_need, 16 * 1024 * 1024), 64 * 1024 * 1024))

    cost = pl.CostEstimate(
        flops=2 * M * H * F + 2 * M * F * O,
        transcendentals=0,
        bytes_accessed=(x2d.size * 2 + w1p.size * 2 + w2p.size * 2
                        + b1p.size * 4 + b2p.size * 4 + Mp * Op * out_itemsize))

    single_step = (Fp == tf)

    if single_step:
        # Whole F resident: fully fused, no scratch, no reduction axis.
        out2d = pl.pallas_call(
            _ffn_kernel_fused,
            out_shape=jax.ShapeDtypeStruct((Mp, Op), x.dtype),
            grid_spec=pltpu.PrefetchScalarGridSpec(
                num_scalar_prefetch=0,
                grid=(Mp // tm,),
                in_specs=[
                    pl.BlockSpec((tm, Hp), lambda i: (i, 0)),   # x tile
                    pl.BlockSpec((Hp, Fp), lambda i: (0, 0)),   # w1 (resident)
                    pl.BlockSpec((1, Fp), lambda i: (0, 0)),    # b1
                    pl.BlockSpec((Fp, Op), lambda i: (0, 0)),   # w2 (resident)
                    pl.BlockSpec((1, Op), lambda i: (0, 0)),    # b2
                ],
                out_specs=pl.BlockSpec((tm, Op), lambda i: (i, 0)),
            ),
            compiler_params=pltpu.CompilerParams(
                dimension_semantics=("parallel",),
                vmem_limit_bytes=vmem_limit),
            cost_estimate=cost,
        )(x2d, w1p, b1p, w2p, b2p)
    else:
        out2d = pl.pallas_call(
            _ffn_kernel_tiled,
            out_shape=jax.ShapeDtypeStruct((Mp, Op), x.dtype),
            grid_spec=pltpu.PrefetchScalarGridSpec(
                num_scalar_prefetch=0,
                grid=(Mp // tm, Fp // tf),
                in_specs=[
                    pl.BlockSpec((tm, Hp), lambda i, k: (i, 0)),   # x tile (constant over k)
                    pl.BlockSpec((Hp, tf), lambda i, k: (0, k)),   # w1 F-slice
                    pl.BlockSpec((1, tf), lambda i, k: (0, k)),    # b1 F-slice
                    pl.BlockSpec((tf, Op), lambda i, k: (k, 0)),   # w2 F-slice
                    pl.BlockSpec((1, Op), lambda i, k: (0, 0)),    # b2
                ],
                out_specs=pl.BlockSpec((tm, Op), lambda i, k: (i, 0)),
                scratch_shapes=[pltpu.VMEM((tm, Op), jnp.float32)],
            ),
            compiler_params=pltpu.CompilerParams(
                dimension_semantics=("parallel", "arbitrary"),
                vmem_limit_bytes=vmem_limit),
            cost_estimate=cost,
        )(x2d, w1p, b1p, w2p, b2p)

    return out2d[:M, :O].reshape(B, S, O)


def init_params(key, hidden_size, ffn_size, out_size):
    """Deterministic init matching nn.Linear's U(-1/sqrt(fan_in), 1/sqrt(fan_in))."""
    k1, k2, k3, k4 = jax.random.split(key, 4)
    lim1 = 1.0 / jnp.sqrt(hidden_size)
    lim2 = 1.0 / jnp.sqrt(ffn_size)
    # stored as (in, out) — transpose of torch's (out, in)
    w1 = jax.random.uniform(k1, (hidden_size, ffn_size), jnp.float32, -lim1, lim1)
    b1 = jax.random.uniform(k2, (1, ffn_size), jnp.float32, -lim1, lim1)
    w2 = jax.random.uniform(k3, (ffn_size, out_size), jnp.float32, -lim2, lim2)
    b2 = jax.random.uniform(k4, (1, out_size), jnp.float32, -lim2, lim2)
    return w1, b1, w2, b2


if __name__ == "__main__":
    hidden_size, ffn_size, out_size = 32, 64, 32
    batch, seq = 2, 8

    key = jax.random.PRNGKey(0)
    kx, kp = jax.random.split(key)
    x = jax.random.normal(kx, (batch, seq, hidden_size), jnp.float32)
    w1, b1, w2, b2 = init_params(kp, hidden_size, ffn_size, out_size)

    out = ffn_forward(x, w1, b1, w2, b2)
    out = jax.block_until_ready(out)

    # Also exercise the k-tiled reduction path (F larger than one tile) for coverage.
    big_F = 640
    w1b_, b1b_, w2b_, b2b_ = init_params(jax.random.PRNGKey(1), hidden_size, big_F, out_size)
    out_big = jax.block_until_ready(
        ffn_forward(x, w1b_, b1b_, w2b_, b2b_, tf=512))

    # Reference in plain JAX with the same bf16 operand rounding (f32 accumulation).
    def ref_ffn(x, w1, b1, w2, b2):
        xb = x.reshape(-1, x.shape[-1]).astype(jnp.bfloat16).astype(jnp.float32)
        w1r = w1.astype(jnp.bfloat16).astype(jnp.float32)
        w2r = w2.astype(jnp.bfloat16).astype(jnp.float32)
        h = jnp.maximum(xb @ w1r + b1, 0.0)
        y = h.astype(jnp.bfloat16).astype(jnp.float32) @ w2r + b2
        return y.reshape(x.shape[0], x.shape[1], -1)

    ref = ref_ffn(x, w1, b1, w2, b2)
    ref_big = ref_ffn(x, w1b_, b1b_, w2b_, b2b_)

    assert out.shape == (batch, seq, out_size)
    assert out_big.shape == (batch, seq, out_size)
    err = float(jnp.max(jnp.abs(out - ref)))
    err_big = float(jnp.max(jnp.abs(out_big - ref_big)))
    assert jnp.allclose(out, ref, atol=2e-2, rtol=2e-2), err
    assert jnp.allclose(out_big, ref_big, atol=2e-2, rtol=2e-2), err_big

    print("KERNEL_OK")
</pallas_src>

<mosaic_0001>
module attributes {stable_mosaic.version = 11 : i64} {
  func.func @_ffn_kernel_fused(%arg0: i32, %arg1: memref<16x128xbf16, #tpu.memory_space<vmem>>, %arg2: memref<128x128xbf16, #tpu.memory_space<vmem>>, %arg3: memref<1x128xf32, #tpu.memory_space<vmem>>, %arg4: memref<128x128xbf16, #tpu.memory_space<vmem>>, %arg5: memref<1x128xf32, #tpu.memory_space<vmem>>, %arg6: memref<16x128xf32, #tpu.memory_space<vmem>>) attributes {dimension_semantics = [#tpu.dimension_semantics<parallel>], iteration_bounds = array<i64: 1>, scalar_prefetch = 0 : i64, scratch_operands = 0 : i64, tpu.core_type = #tpu.core_type<tc>, window_params = [{transform_indices = @transform_0, window_bounds = array<i64: 16, 128>}, {pipeline_mode = #tpu.pipeline_mode<synchronous>, transform_indices = @transform_1, window_bounds = array<i64: 128, 128>}, {pipeline_mode = #tpu.pipeline_mode<synchronous>, transform_indices = @transform_2, window_bounds = array<i64: 1, 128>}, {pipeline_mode = #tpu.pipeline_mode<synchronous>, transform_indices = @transform_3, window_bounds = array<i64: 128, 128>}, {pipeline_mode = #tpu.pipeline_mode<synchronous>, transform_indices = @transform_4, window_bounds = array<i64: 1, 128>}, {transform_indices = @transform_5, window_bounds = array<i64: 16, 128>}]} {
    %c0 = arith.constant 0 : index
    %c0_0 = arith.constant 0 : index
    %0 = vector.load %arg1[%c0, %c0_0] : memref<16x128xbf16, #tpu.memory_space<vmem>>, vector<16x128xbf16>
    %c0_1 = arith.constant 0 : index
    %c0_2 = arith.constant 0 : index
    %1 = vector.load %arg2[%c0_1, %c0_2] : memref<128x128xbf16, #tpu.memory_space<vmem>>, vector<128x128xbf16>
    %cst = arith.constant dense<0.000000e+00> : vector<16x128xf32>
    %2 = tpu.matmul %0, %1, %cst {dimension_numbers = #tpu.dot_dimension_numbers<[1], [0], [0], [1], [0, 0, 1, 1], [], []>} : vector<16x128xbf16>, vector<128x128xbf16>, vector<16x128xf32> -> vector<16x128xf32>
    %c0_3 = arith.constant 0 : index
    %c0_4 = arith.constant 0 : index
    %3 = vector.load %arg3[%c0_3, %c0_4] : memref<1x128xf32, #tpu.memory_space<vmem>>, vector<1x128xf32>
    %4 = vector.broadcast %3 : vector<1x128xf32> to vector<16x128xf32>
    %5 = arith.addf %2, %4 : vector<16x128xf32>
    %cst_5 = arith.constant 0.000000e+00 : f32
    %6 = vector.broadcast %cst_5 : f32 to vector<16x128xf32>
    %7 = arith.maximumf %5, %6 : vector<16x128xf32>
    %8 = arith.truncf %7 : vector<16x128xf32> to vector<16x128xbf16>
    %c0_6 = arith.constant 0 : index
    %c0_7 = arith.constant 0 : index
    %9 = vector.load %arg4[%c0_6, %c0_7] : memref<128x128xbf16, #tpu.memory_space<vmem>>, vector<128x128xbf16>
    %cst_8 = arith.constant dense<0.000000e+00> : vector<16x128xf32>
    %10 = tpu.matmul %8, %9, %cst_8 {dimension_numbers = #tpu.dot_dimension_numbers<[1], [0], [0], [1], [0, 0, 1, 1], [], []>} : vector<16x128xbf16>, vector<128x128xbf16>, vector<16x128xf32> -> vector<16x128xf32>
    %c0_9 = arith.constant 0 : index
    %c0_10 = arith.constant 0 : index
    %11 = vector.load %arg5[%c0_9, %c0_10] : memref<1x128xf32, #tpu.memory_space<vmem>>, vector<1x128xf32>
    %12 = vector.broadcast %11 : vector<1x128xf32> to vector<16x128xf32>
    %13 = arith.addf %10, %12 : vector<16x128xf32>
    %c0_11 = arith.constant 0 : index
    %c0_12 = arith.constant 0 : index
    %14 = vector.load %arg6[%c0_11, %c0_12] : memref<16x128xf32, #tpu.memory_space<vmem>>, vector<16x128xf32>
    tpu.vector_store %arg6[%c0_11, %c0_12], %13 {strides = array<i32>} : memref<16x128xf32, #tpu.memory_space<vmem>>, vector<16x128xf32>,
    return
  }
  func.func @transform_0(%arg0: i32) -> (i32, i32) {
    %c0_i32 = arith.constant 0 : i32
    %c0_i32_0 = arith.constant 0 : i32
    return %arg0, %c0_i32 : i32, i32
  }
  func.func @transform_1(%arg0: i32) -> (i32, i32) {
    %c0_i32 = arith.constant 0 : i32
    %c0_i32_0 = arith.constant 0 : i32
    %c0_i32_1 = arith.constant 0 : i32
    return %c0_i32, %c0_i32_0 : i32, i32
  }
  func.func @transform_2(%arg0: i32) -> (i32, i32) {
    %c0_i32 = arith.constant 0 : i32
    %c0_i32_0 = arith.constant 0 : i32
    %c0_i32_1 = arith.constant 0 : i32
    return %c0_i32, %c0_i32_0 : i32, i32
  }
  func.func @transform_3(%arg0: i32) -> (i32, i32) {
    %c0_i32 = arith.constant 0 : i32
    %c0_i32_0 = arith.constant 0 : i32
    %c0_i32_1 = arith.constant 0 : i32
    return %c0_i32, %c0_i32_0 : i32, i32
  }
  func.func @transform_4(%arg0: i32) -> (i32, i32) {
    %c0_i32 = arith.constant 0 : i32
    %c0_i32_0 = arith.constant 0 : i32
    %c0_i32_1 = arith.constant 0 : i32
    return %c0_i32, %c0_i32_0 : i32, i32
  }
  func.func @transform_5(%arg0: i32) -> (i32, i32) {
    %c0_i32 = arith.constant 0 : i32
    %c0_i32_0 = arith.constant 0 : i32
    return %arg0, %c0_i32 : i32, i32
  }
}

</mosaic_0001>

<llo_original>
// kernel: ffn_forward.1
$region0: #{ffn_forward.1}
  #allocation0 [shape = 'u32[]', space=smem, size = 0x4, offset = 0x4, fixed_abs, tag = 'smem constant byte address 0x4 - core index']
  #allocation1 [shape = 'u32[144,128]{1,0:T(1,128)}', space=vmem, size = 0x12000, scoped, tag = 'internal scratch']
  %s0 = inlined_call_operand.vmem [shape: bf16[16,128], index: 0, kind: input, shape index: {}]
  %s1 = inlined_call_operand.vmem [shape: bf16[128,128], index: 1, kind: input, shape index: {}]
  %s2 = inlined_call_operand.vmem [shape: f32[1,128], index: 2, kind: input, shape index: {}]
  %s3 = inlined_call_operand.vmem [shape: bf16[128,128], index: 3, kind: input, shape index: {}]
  %s4 = inlined_call_operand.vmem [shape: f32[1,128], index: 4, kind: input, shape index: {}]
  %s5 = inlined_call_operand.vmem [shape: f32[16,128], index: 5, kind: output, shape index: {}]
  %s6 = sld [smem:[#allocation0]]
  $region30: #{ffn_forward.1} parent=0
    _
  %s8 = ssub.s32 1, %s6
  %s9 = scalar_select 0, %s8, %s6
  // Predicated region
  $region2: #{ffn_forward.1} parent=0 // pred_check
    _
  $region3: #{ffn_forward.1} parent=0 // pred_check_branch
    %11 = sbr.rel (0) target = $region5
  $region4: #{ffn_forward.1} parent=0 // pred_region
    _
  $region5: #{ffn_forward.1} parent=0 // pred_fallthru
    _
  // Predicated region
  $region6: #{ffn_forward.1} parent=0 // pred_check
    _
  $region7: #{ffn_forward.1} parent=0 // pred_check_branch
    %13 = sbr.rel (0) target = $region9
  $region8: #{ffn_forward.1} parent=0 // pred_region
    _
  $region9: #{ffn_forward.1} parent=0 // pred_fallthru
    _
  // Predicated region
  $region10: #{ffn_forward.1} parent=0 // pred_check
    _
  $region11: #{ffn_forward.1} parent=0 // pred_check_branch
    %15 = sbr.rel (0) target = $region13
  $region12: #{ffn_forward.1} parent=0 // pred_region
    _
  $region13: #{ffn_forward.1} parent=0 // pred_fallthru
    _
  // Predicated region
  $region14: #{ffn_forward.1} parent=0 // pred_check
    _
  $region15: #{ffn_forward.1} parent=0 // pred_check_branch
    %17 = sbr.rel (0) target = $region17
  $region16: #{ffn_forward.1} parent=0 // pred_region
    _
  $region17: #{ffn_forward.1} parent=0 // pred_fallthru
    _
  // Predicated region
  $region18: #{ffn_forward.1} parent=0 // pred_check
    _
  $region19: #{ffn_forward.1} parent=0 // pred_check_branch
    %19 = sbr.rel (0) target = $region21
  $region20: #{ffn_forward.1} parent=0 // pred_region
    _
  $region21: #{ffn_forward.1} parent=0 // pred_fallthru
    _
  %v21 = vld [vmem:[%s0] sm:$0xf]
  %v22 = vld [vmem:[%s0 + $0x4] sm:$0xf]
  %v23 = vld [vmem:[%s1] sm:$0xf]
  %v24 = vld [vmem:[%s1 + $0x4] sm:$0xf]
  %v25 = vld [vmem:[%s1 + $0x8] sm:$0xf]
  %v26 = vld [vmem:[%s1 + $0xc] sm:$0xf]
  %v27 = vld [vmem:[%s1 + $0x10] sm:$0xf]
  %v28 = vld [vmem:[%s1 + $0x14] sm:$0xf]
  %v29 = vld [vmem:[%s1 + $0x18] sm:$0xf]
  %v30 = vld [vmem:[%s1 + $0x1c] sm:$0xf]
  %v31 = vld [vmem:[%s1 + $0x20] sm:$0xf]
  %v32 = vld [vmem:[%s1 + $0x24] sm:$0xf]
  %v33 = vld [vmem:[%s1 + $0x28] sm:$0xf]
  %v34 = vld [vmem:[%s1 + $0x2c] sm:$0xf]
  %v35 = vld [vmem:[%s1 + $0x30] sm:$0xf]
  %v36 = vld [vmem:[%s1 + $0x34] sm:$0xf]
  %v37 = vld [vmem:[%s1 + $0x38] sm:$0xf]
  %v38 = vld [vmem:[%s1 + $0x3c] sm:$0xf]
  %v39 = vld [vmem:[%s2] sm:$0x1]
  %v41 = vlaneseq
  %v42 = vshrl.u32 %v41, 7
  %v43 = vsub.s32 0, %v42
  %v44 = vrot.slane %v39, %v43
  %v48 = vunpack.c.l.b16 %v21
  %v49 = vunpack.c.l.b16 %v22
  %v50 = vpack.c.b16 %v49, %v48
  %v68 = vunpack.c.l.b16 %v23
  %v69 = vunpack.c.l.b16 %v24
  %v70 = vunpack.c.l.b16 %v25
  %v71 = vunpack.c.l.b16 %v26
  %v72 = vunpack.c.l.b16 %v27
  %v73 = vunpack.c.l.b16 %v28
  %v74 = vunpack.c.l.b16 %v29
  %v75 = vunpack.c.l.b16 %v30
  %v76 = vunpack.c.l.b16 %v31
  %v77 = vunpack.c.l.b16 %v32
  %v78 = vunpack.c.l.b16 %v33
  %v79 = vunpack.c.l.b16 %v34
  %v80 = vunpack.c.l.b16 %v35
  %v81 = vunpack.c.l.b16 %v36
  %v82 = vunpack.c.l.b16 %v37
  %v83 = vunpack.c.l.b16 %v38
  %v84 = vpack.c.b16 %v69, %v68
  %v85 = vpack.c.b16 %v71, %v70
  %v86 = vpack.c.b16 %v73, %v72
  %v87 = vpack.c.b16 %v75, %v74
  %v88 = vpack.c.b16 %v77, %v76
  %v89 = vpack.c.b16 %v79, %v78
  %v90 = vpack.c.b16 %v81, %v80
  %v91 = vpack.c.b16 %v83, %v82
  %100 = vmatprep.subr.bf16.mxu0 0
  %101 = vmatpush1.bf16.msra.mxu0 %v84
  %102 = vmatprep.subr.bf16.mxu0 0
  %103 = vmatpush1.bf16.msra.mxu0 %v85
  %104 = vmatprep.subr.bf16.mxu0 0
  %105 = vmatpush1.bf16.msra.mxu0 %v86
  %106 = vmatprep.subr.bf16.mxu0 0
  %107 = vmatpush1.bf16.msra.mxu0 %v87
  %108 = vmatprep.subr.bf16.mxu0 0
  %109 = vmatpush1.bf16.msra.mxu0 %v88
  %110 = vmatprep.subr.bf16.mxu0 0
  %111 = vmatpush1.bf16.msra.mxu0 %v89
  %112 = vmatprep.subr.bf16.mxu0 0
  %113 = vmatpush1.bf16.msra.mxu0 %v90
  %114 = vmatprep.subr.bf16.mxu0 0
  %115 = vmatpush1.bf16.msra.mxu0 %v91
  %116 = vmatprep.subr.bf16.mxu0 0
  %117 = vmatpush1.bf16.msra.mxu0 0
  %118 = vmatprep.subr.bf16.mxu0 0
  %119 = vmatpush1.bf16.msra.mxu0 0
  %120 = vmatprep.subr.bf16.mxu0 0
  %121 = vmatpush1.bf16.msra.mxu0 0
  %122 = vmatprep.subr.bf16.mxu0 0
  %123 = vmatpush1.bf16.msra.mxu0 0
  %124 = vmatprep.subr.bf16.mxu0 0
  %125 = vmatpush1.bf16.msra.mxu0 0
  %126 = vmatprep.subr.bf16.mxu0 0
  %127 = vmatpush1.bf16.msra.mxu0 0
  %128 = vmatprep.subr.bf16.mxu0 0
  %129 = vmatpush1.bf16.msra.mxu0 0
  %130 = vmatprep.subr.bf16.mxu0 0
  %131 = vmatpush1.bf16.msra.mxu0 0
  %132 = vmatprep.mubr.bf16.mxu0 0
  %133 = vmatmul.mubr.bf16.gmra.mrb[0].mxu0 %v50
  %v134 = vpop.f32.mrb[0].mxu0
  %v135 = vadd.f32 %v44, %v134
  %v136 = vpop.f32.mrb[0].mxu0
  %v137 = vpop.f32.mrb[0].mxu0
  %v138 = vadd.f32 %v44, %v137
  %v139 = vpop.f32.mrb[0].mxu0
  %140 = vdwg.mxu0
  %v141 = vmax.f32 %v135, 0.0
  %v142 = vmax.f32 %v138, 0.0
  %v143 = vpack.c.bf16 %v142, %v141
  %v144 = vld [vmem:[%s3] sm:$0xf]
  %v145 = vld [vmem:[%s3 + $0x4] sm:$0xf]
  %v146 = vld [vmem:[%s3 + $0x8] sm:$0xf]
  %v147 = vld [vmem:[%s3 + $0xc] sm:$0xf]
  %v148 = vld [vmem:[%s3 + $0x10] sm:$0xf]
  %v149 = vld [vmem:[%s3 + $0x14] sm:$0xf]
  %v150 = vld [vmem:[%s3 + $0x18] sm:$0xf]
  %v151 = vld [vmem:[%s3 + $0x1c] sm:$0xf]
  %v152 = vld [vmem:[%s3 + $0x20] sm:$0xf]
  %v153 = vld [vmem:[%s3 + $0x24] sm:$0xf]
  %v154 = vld [vmem:[%s3 + $0x28] sm:$0xf]
  %v155 = vld [vmem:[%s3 + $0x2c] sm:$0xf]
  %v156 = vld [vmem:[%s3 + $0x30] sm:$0xf]
  %v157 = vld [vmem:[%s3 + $0x34] sm:$0xf]
  %v158 = vld [vmem:[%s3 + $0x38] sm:$0xf]
  %v159 = vld [vmem:[%s3 + $0x3c] sm:$0xf]
  %v160 = vld [vmem:[%s4] sm:$0x1]
  %v162 = vlaneseq
  %v163 = vshrl.u32 %v162, 7
  %v164 = vsub.s32 0, %v163
  %v165 = vrot.slane %v160, %v164
  %v183 = vunpack.c.l.b16 %v144
  %v184 = vunpack.c.l.b16 %v145
  %v185 = vunpack.c.l.b16 %v146
  %v186 = vunpack.c.l.b16 %v147
  %v187 = vunpack.c.l.b16 %v148
  %v188 = vunpack.c.l.b16 %v149
  %v189 = vunpack.c.l.b16 %v150
  %v190 = vunpack.c.l.b16 %v151
  %v191 = vunpack.c.l.b16 %v152
  %v192 = vunpack.c.l.b16 %v153
  %v193 = vunpack.c.l.b16 %v154
  %v194 = vunpack.c.l.b16 %v155
  %v195 = vunpack.c.l.b16 %v156
  %v196 = vunpack.c.l.b16 %v157
  %v197 = vunpack.c.l.b16 %v158
  %v198 = vunpack.c.l.b16 %v159
  %v199 = vpack.c.b16 %v184, %v183
  %v200 = vpack.c.b16 %v186, %v185
  %v201 = vpack.c.b16 %v188, %v187
  %v202 = vpack.c.b16 %v190, %v189
  %v203 = vpack.c.b16 %v192, %v191
  %v204 = vpack.c.b16 %v194, %v193
  %v205 = vpack.c.b16 %v196, %v195
  %v206 = vpack.c.b16 %v198, %v197
  %215 = vmatprep.subr.bf16.mxu0 0
  %216 = vmatpush1.bf16.msra.mxu0 %v199
  %217 = vmatprep.subr.bf16.mxu0 0
  %218 = vmatpush1.bf16.msra.mxu0 %v200
  %219 = vmatprep.subr.bf16.mxu0 0
  %220 = vmatpush1.bf16.msra.mxu0 %v201
  %221 = vmatprep.subr.bf16.mxu0 0
  %222 = vmatpush1.bf16.msra.mxu0 %v202
  %223 = vmatprep.subr.bf16.mxu0 0
  %224 = vmatpush1.bf16.msra.mxu0 %v203
  %225 = vmatprep.subr.bf16.mxu0 0
  %226 = vmatpush1.bf16.msra.mxu0 %v204
  %227 = vmatprep.subr.bf16.mxu0 0
  %228 = vmatpush1.bf16.msra.mxu0 %v205
  %229 = vmatprep.subr.bf16.mxu0 0
  %230 = vmatpush1.bf16.msra.mxu0 %v206
  %231 = vmatprep.subr.bf16.mxu0 0
  %232 = vmatpush1.bf16.msra.mxu0 0
  %233 = vmatprep.subr.bf16.mxu0 0
  %234 = vmatpush1.bf16.msra.mxu0 0
  %235 = vmatprep.subr.bf16.mxu0 0
  %236 = vmatpush1.bf16.msra.mxu0 0
  %237 = vmatprep.subr.bf16.mxu0 0
  %238 = vmatpush1.bf16.msra.mxu0 0
  %239 = vmatprep.subr.bf16.mxu0 0
  %240 = vmatpush1.bf16.msra.mxu0 0
  %241 = vmatprep.subr.bf16.mxu0 0
  %242 = vmatpush1.bf16.msra.mxu0 0
  %243 = vmatprep.subr.bf16.mxu0 0
  %244 = vmatpush1.bf16.msra.mxu0 0
  %245 = vmatprep.subr.bf16.mxu0 0
  %246 = vmatpush1.bf16.msra.mxu0 0
  %247 = vmatprep.mubr.bf16.mxu0 0
  %248 = vmatmul.mubr.bf16.gmra.mrb[0].mxu0 %v143
  %v249 = vpop.f32.mrb[0].mxu0
  %v250 = vadd.f32 %v165, %v249
  %v251 = vpop.f32.mrb[0].mxu0
  %v252 = vpop.f32.mrb[0].mxu0
  %v253 = vadd.f32 %v165, %v252
  %v254 = vpop.f32.mrb[0].mxu0
  %255 = vdwg.mxu0
  %256 = vst [vmem:[%s5] sm:$0xff] %v250
  %257 = vst [vmem:[%s5 + $0x8] sm:$0xff] %v253
  // Predicated region
  $region22: #{ffn_forward.1} parent=0 // pred_check
    _
  $region23: #{ffn_forward.1} parent=0 // pred_check_branch
    %259 = sbr.rel (0) target = $region25
  $region24: #{ffn_forward.1} parent=0 // pred_region
    _
  $region25: #{ffn_forward.1} parent=0 // pred_fallthru
    _
  // Predicated region
  $region26: #{ffn_forward.1} parent=0 // pred_check
    _
  $region27: #{ffn_forward.1} parent=0 // pred_check_branch
    %261 = sbr.rel (0) target = $region29
  $region28: #{ffn_forward.1} parent=0 // pred_region
    _
  $region29: #{ffn_forward.1} parent=0 // pred_fallthru
    _

</llo_original>
